<compile_context>
chip_gen: v6e
topology: v6e:2x2x1
jax: 0.10.0
libtpu: 0.0.40
codegen_flags: <defaults>
</compile_context>

<pallas_src>
import functools

import jax
import jax.numpy as jnp
from jax.experimental import pallas as pl
from jax.experimental.pallas import tpu as pltpu

_LANE = 128
_SUBLANE = 8
_NEG_BIAS = -1e30  # f32 bias for padded class columns -> exp() underflows to 0 after max-sub


def _round_up(x, m):
    return (x + m - 1) // m * m


def _vmem_capacity_bytes():
    """Physical VMEM per TensorCore; conservative fallback if the query is unavailable."""
    try:
        return int(pltpu.get_tpu_info().vmem_capacity_bytes)
    except Exception:
        return 64 << 20  # v7x per-TensorCore VMEM (smallest of the supported generations)


def _mlp_softmax_kernel(x_ref, w1_ref, b1_ref, w2_ref, b2_ref, out_ref, *, matmul_dtype):
    f32 = jnp.float32
    # fc1: (bf16, bf16) operands on the MXU, f32 accumulation; bias + ReLU in f32.
    h = jnp.dot(x_ref[...].astype(matmul_dtype), w1_ref[...], preferred_element_type=f32)
    h = jnp.maximum(h + b1_ref[...], 0.0)
    # fc2: same; padded class columns have zero weights and a -1e30 f32 bias.
    logits = jnp.dot(h.astype(matmul_dtype), w2_ref[...], preferred_element_type=f32)
    logits = logits + b2_ref[...]
    # Numerically-stable softmax along dim=1, all f32.  Exact division — the EUP approximate
    # reciprocal is not accurate enough for tight probability / row-sum checks.
    m = jnp.max(logits, axis=1, keepdims=True)
    e = jnp.exp(logits - m)
    out_ref[...] = (e / jnp.sum(e, axis=1, keepdims=True)).astype(out_ref.dtype)


@functools.partial(jax.jit, static_argnames=("block_batch", "matmul_dtype"))
def dnn_classifier_forward(x, w1, b1, w2, b2, *, block_batch=1024, matmul_dtype=jnp.bfloat16):
    """x: (B, input_dim); w1: (input_dim, hidden); b1: (hidden,) or (1, hidden);
    w2: (hidden, nb_categories); b2: (nb_categories,) or (1, nb_categories)."""
    batch, input_dim = x.shape
    hidden = w1.shape[1]
    nb_categories = w2.shape[1]

    f32 = jnp.float32
    mm_bytes = jnp.dtype(matmul_dtype).itemsize

    # Lane-dense padded widths (unmasked 128-lane MXU work and vst stores).
    hidden_p = _round_up(hidden, _LANE)
    classes_p = _round_up(nb_categories, _LANE)

    # ---- Generation-aware VMEM budget -> batch-tile size ---------------------------------
    capacity = _vmem_capacity_bytes()
    budget = int(capacity * 0.8) - (4 << 20)  # headroom for Mosaic internal scratch/sems
    weight_bytes = (mm_bytes * (input_dim * hidden_p + hidden_p * classes_p)
                    + 4 * (hidden_p + classes_p))
    # Per batch row: double-buffered f32 x tile + double-buffered f32 out tile
    # + f32 activation scratch (h, logits).  Weights are constant-index (single-resident).
    per_row_bytes = 2 * 4 * input_dim + 2 * 4 * classes_p + 4 * (hidden_p + classes_p)
    tb_budget = max((budget - weight_bytes) // per_row_bytes, _SUBLANE)
    # Prefer >= 4 grid steps: shards across v7x's two TensorCores and keeps each pipelining.
    tb_split = _round_up(max(-(-batch // 4), 1), _SUBLANE)

    tb = int(max(min(block_batch, tb_budget, tb_split), _SUBLANE))
    tb = _round_up(tb, _SUBLANE)
    if tb >= 256:
        tb = (tb // 256) * 256  # fill the 2x256^2 MXU on v6e/v7x; v5e is fine 128-aligned
    grid = (pl.cdiv(batch, tb),)  # ragged last tile: rows independent, OOB rows discarded
    # TODO(synk): for very large input_dim (>= ~4K) add a K-tiled "arbitrary" grid axis with
    # an fc1 accumulator instead of loading the whole input_dim row per tile.

    vmem_limit = int(min(max(int(1.5 * (weight_bytes + tb * per_row_bytes)), 32 << 20),
                         int(capacity * 0.85)))

    # ---- Operand prep (no batch padding of x: avoids a full extra HBM pass) ---------------
    # Padded hidden columns: zero weights + zero bias -> ReLU(0)=0, and the matching zero
    # rows in w2 contribute nothing, so the padding is exact.
    w1_p = jnp.pad(w1.astype(matmul_dtype), ((0, 0), (0, hidden_p - hidden)))
    b1_p = jnp.pad(b1.astype(f32).reshape(1, -1), ((0, 0), (0, hidden_p - hidden)))
    # Padded class columns: zero weights + very negative f32 bias -> ~0 softmax probability.
    w2_p = jnp.pad(w2.astype(matmul_dtype),
                   ((0, hidden_p - hidden), (0, classes_p - nb_categories)))
    b2_p = jnp.pad(b2.astype(f32).reshape(1, -1), ((0, 0), (0, classes_p - nb_categories)),
                   constant_values=_NEG_BIAS)
    x_f32 = x.astype(f32)

    cost = pl.CostEstimate(
        flops=2 * batch * (input_dim * hidden_p + hidden_p * classes_p),
        transcendentals=batch * classes_p,
        bytes_accessed=4 * batch * (input_dim + classes_p) + weight_bytes,
    )

    kernel = functools.partial(_mlp_softmax_kernel, matmul_dtype=matmul_dtype)
    out_p = pl.pallas_call(
        kernel,
        out_shape=jax.ShapeDtypeStruct((batch, classes_p), f32),
        grid_spec=pltpu.PrefetchScalarGridSpec(
            num_scalar_prefetch=0,
            grid=grid,
            in_specs=[
                pl.BlockSpec((tb, input_dim), lambda i: (i, 0)),        # x: tiled over batch
                pl.BlockSpec((input_dim, hidden_p), lambda i: (0, 0)),  # w1: VMEM-resident
                pl.BlockSpec((1, hidden_p), lambda i: (0, 0)),          # b1
                pl.BlockSpec((hidden_p, classes_p), lambda i: (0, 0)),  # w2
                pl.BlockSpec((1, classes_p), lambda i: (0, 0)),         # b2
            ],
            out_specs=pl.BlockSpec((tb, classes_p), lambda i: (i, 0)),
        ),
        compiler_params=pltpu.CompilerParams(
            dimension_semantics=("parallel",),
            vmem_limit_bytes=vmem_limit,
        ),
        cost_estimate=cost,
    )(x_f32, w1_p, b1_p, w2_p, b2_p)

    # Strip the padded class columns (no batch padding to strip).
    return out_p[:, :nb_categories]


def init_params(key, input_dim, nb_categories, hidden_dim=100):
    """Deterministic init mimicking PyTorch nn.Linear default (uniform +/- 1/sqrt(fan_in)).
    Weights stored transposed: (in_features, out_features)."""
    k1, k2, k3, k4 = jax.random.split(key, 4)
    bound1 = 1.0 / jnp.sqrt(input_dim)
    bound2 = 1.0 / jnp.sqrt(hidden_dim)
    w1 = jax.random.uniform(k1, (input_dim, hidden_dim), jnp.float32, -bound1, bound1)
    b1 = jax.random.uniform(k2, (1, hidden_dim), jnp.float32, -bound1, bound1)
    w2 = jax.random.uniform(k3, (hidden_dim, nb_categories), jnp.float32, -bound2, bound2)
    b2 = jax.random.uniform(k4, (1, nb_categories), jnp.float32, -bound2, bound2)
    return w1, b1, w2, b2


def _reference_forward(x, w1, b1, w2, b2):
    hp = jax.lax.Precision.HIGHEST
    h = jnp.maximum(jnp.dot(x, w1, precision=hp) + b1, 0.0)
    logits = jnp.dot(h, w2, precision=hp) + b2
    return jax.nn.softmax(logits, axis=1)


if __name__ == "__main__":
    key = jax.random.PRNGKey(0)
    batch, input_dim, hidden_dim, nb_categories = 20, 32, 100, 8

    kx, kp = jax.random.split(key)
    x = jax.random.normal(kx, (batch, input_dim), jnp.float32)
    w1, b1, w2, b2 = init_params(kp, input_dim, nb_categories, hidden_dim)

    ref = _reference_forward(x, w1, b1, w2, b2)

    # Default path: bf16 MXU operands, multi-step ragged-batch grid (tb=8, 3 grid steps).
    out = jax.block_until_ready(dnn_classifier_forward(x, w1, b1, w2, b2))
    assert out.shape == (batch, nb_categories)
    assert jnp.allclose(out, ref, atol=1e-2, rtol=1e-2)          # bf16-operand tolerance
    assert jnp.allclose(jnp.sum(out, axis=1), 1.0, atol=1e-3)

    # f32-operand path (tighter tolerance), small tile to exercise the multi-tile grid.
    out32 = jax.block_until_ready(
        dnn_classifier_forward(x, w1, b1, w2, b2, block_batch=8, matmul_dtype=jnp.float32))
    assert out32.shape == (batch, nb_categories)
    assert jnp.allclose(out32, ref, atol=5e-3, rtol=5e-3)
    assert jnp.allclose(jnp.sum(out32, axis=1), 1.0, atol=1e-3)

    print("KERNEL_OK")
</pallas_src>

<mosaic_0001>
module attributes {stable_mosaic.version = 11 : i64} {
  func.func @_mlp_softmax_kernel(%arg0: i32, %arg1: memref<8x32xf32, #tpu.memory_space<vmem>>, %arg2: memref<32x128xbf16, #tpu.memory_space<vmem>>, %arg3: memref<1x128xf32, #tpu.memory_space<vmem>>, %arg4: memref<128x128xbf16, #tpu.memory_space<vmem>>, %arg5: memref<1x128xf32, #tpu.memory_space<vmem>>, %arg6: memref<8x128xf32, #tpu.memory_space<vmem>>) attributes {dimension_semantics = [#tpu.dimension_semantics<parallel>], iteration_bounds = array<i64: 3>, scalar_prefetch = 0 : i64, scratch_operands = 0 : i64, tpu.core_type = #tpu.core_type<tc>, window_params = [{transform_indices = @transform_0, window_bounds = array<i64: 8, 32>}, {pipeline_mode = #tpu.pipeline_mode<synchronous>, transform_indices = @transform_1, window_bounds = array<i64: 32, 128>}, {pipeline_mode = #tpu.pipeline_mode<synchronous>, transform_indices = @transform_2, window_bounds = array<i64: 1, 128>}, {pipeline_mode = #tpu.pipeline_mode<synchronous>, transform_indices = @transform_3, window_bounds = array<i64: 128, 128>}, {pipeline_mode = #tpu.pipeline_mode<synchronous>, transform_indices = @transform_4, window_bounds = array<i64: 1, 128>}, {transform_indices = @transform_5, window_bounds = array<i64: 8, 128>}]} {
    %c0 = arith.constant 0 : index
    %c0_0 = arith.constant 0 : index
    %0 = vector.load %arg1[%c0, %c0_0] : memref<8x32xf32, #tpu.memory_space<vmem>>, vector<8x32xf32>
    %1 = arith.truncf %0 : vector<8x32xf32> to vector<8x32xbf16>
    %c0_1 = arith.constant 0 : index
    %c0_2 = arith.constant 0 : index
    %2 = vector.load %arg2[%c0_1, %c0_2] : memref<32x128xbf16, #tpu.memory_space<vmem>>, vector<32x128xbf16>
    %cst = arith.constant dense<0.000000e+00> : vector<8x128xf32>
    %3 = tpu.matmul %1, %2, %cst {dimension_numbers = #tpu.dot_dimension_numbers<[1], [0], [0], [1], [0, 0, 1, 1], [], []>} : vector<8x32xbf16>, vector<32x128xbf16>, vector<8x128xf32> -> vector<8x128xf32>
    %c0_3 = arith.constant 0 : index
    %c0_4 = arith.constant 0 : index
    %4 = vector.load %arg3[%c0_3, %c0_4] : memref<1x128xf32, #tpu.memory_space<vmem>>, vector<1x128xf32>
    %5 = vector.broadcast %4 : vector<1x128xf32> to vector<8x128xf32>
    %6 = arith.addf %3, %5 : vector<8x128xf32>
    %cst_5 = arith.constant 0.000000e+00 : f32
    %7 = vector.broadcast %cst_5 : f32 to vector<8x128xf32>
    %8 = arith.maximumf %6, %7 : vector<8x128xf32>
    %9 = arith.truncf %8 : vector<8x128xf32> to vector<8x128xbf16>
    %c0_6 = arith.constant 0 : index
    %c0_7 = arith.constant 0 : index
    %10 = vector.load %arg4[%c0_6, %c0_7] : memref<128x128xbf16, #tpu.memory_space<vmem>>, vector<128x128xbf16>
    %cst_8 = arith.constant dense<0.000000e+00> : vector<8x128xf32>
    %11 = tpu.matmul %9, %10, %cst_8 {dimension_numbers = #tpu.dot_dimension_numbers<[1], [0], [0], [1], [0, 0, 1, 1], [], []>} : vector<8x128xbf16>, vector<128x128xbf16>, vector<8x128xf32> -> vector<8x128xf32>
    %c0_9 = arith.constant 0 : index
    %c0_10 = arith.constant 0 : index
    %12 = vector.load %arg5[%c0_9, %c0_10] : memref<1x128xf32, #tpu.memory_space<vmem>>, vector<1x128xf32>
    %13 = vector.broadcast %12 : vector<1x128xf32> to vector<8x128xf32>
    %14 = arith.addf %11, %13 : vector<8x128xf32>
    %cst_11 = arith.constant dense<0xFF800000> : vector<8xf32>
    %15 = vector.multi_reduction <maximumf>, %14, %cst_11 [1] : vector<8x128xf32> to vector<8xf32>
    %16 = vector.shape_cast %15 : vector<8xf32> to vector<8x1xf32>
    %17 = vector.broadcast %16 : vector<8x1xf32> to vector<8x128xf32>
    %18 = arith.subf %14, %17 : vector<8x128xf32>
    %19 = math.exp %18 : vector<8x128xf32>
    %cst_12 = arith.constant dense<0.000000e+00> : vector<8xf32>
    %20 = vector.multi_reduction <add>, %19, %cst_12 [1] : vector<8x128xf32> to vector<8xf32>
    %21 = vector.shape_cast %20 : vector<8xf32> to vector<8x1xf32>
    %22 = vector.broadcast %21 : vector<8x1xf32> to vector<8x128xf32>
    %23 = arith.divf %19, %22 : vector<8x128xf32>
    %c0_13 = arith.constant 0 : index
    %c0_14 = arith.constant 0 : index
    %24 = vector.load %arg6[%c0_13, %c0_14] : memref<8x128xf32, #tpu.memory_space<vmem>>, vector<8x128xf32>
    tpu.vector_store %arg6[%c0_13, %c0_14], %23 {strides = array<i32>} : memref<8x128xf32, #tpu.memory_space<vmem>>, vector<8x128xf32>,
    return
  }
  func.func @transform_0(%arg0: i32) -> (i32, i32) {
    %c0_i32 = arith.constant 0 : i32
    %c0_i32_0 = arith.constant 0 : i32
    return %arg0, %c0_i32 : i32, i32
  }
  func.func @transform_1(%arg0: i32) -> (i32, i32) {
    %c0_i32 = arith.constant 0 : i32
    %c0_i32_0 = arith.constant 0 : i32
    %c0_i32_1 = arith.constant 0 : i32
    return %c0_i32, %c0_i32_0 : i32, i32
  }
  func.func @transform_2(%arg0: i32) -> (i32, i32) {
    %c0_i32 = arith.constant 0 : i32
    %c0_i32_0 = arith.constant 0 : i32
    %c0_i32_1 = arith.constant 0 : i32
    return %c0_i32, %c0_i32_0 : i32, i32
  }
  func.func @transform_3(%arg0: i32) -> (i32, i32) {
    %c0_i32 = arith.constant 0 : i32
    %c0_i32_0 = arith.constant 0 : i32
    %c0_i32_1 = arith.constant 0 : i32
    return %c0_i32, %c0_i32_0 : i32, i32
  }
  func.func @transform_4(%arg0: i32) -> (i32, i32) {
    %c0_i32 = arith.constant 0 : i32
    %c0_i32_0 = arith.constant 0 : i32
    %c0_i32_1 = arith.constant 0 : i32
    return %c0_i32, %c0_i32_0 : i32, i32
  }
  func.func @transform_5(%arg0: i32) -> (i32, i32) {
    %c0_i32 = arith.constant 0 : i32
    %c0_i32_0 = arith.constant 0 : i32
    return %arg0, %c0_i32 : i32, i32
  }
}

</mosaic_0001>

<llo_original>
// kernel: dnn_classifier_forward.1
$region0: #{dnn_classifier_forward.1}
  #allocation0 [shape = 'u32[]', space=smem, size = 0x4, offset = 0x4, fixed_abs, tag = 'smem constant byte address 0x4 - core index']
  #allocation1 [shape = 'u32[144,128]{1,0:T(1,128)}', space=vmem, size = 0x12000, scoped, tag = 'internal scratch']
  %s0 = inlined_call_operand.vmem [shape: f32[20,32], index: 0, kind: input, shape index: {}]
  %s1 = inlined_call_operand.vmem [shape: bf16[32,128], index: 1, kind: input, shape index: {}]
  %s2 = inlined_call_operand.vmem [shape: f32[1,128], index: 2, kind: input, shape index: {}]
  %s3 = inlined_call_operand.vmem [shape: bf16[128,128], index: 3, kind: input, shape index: {}]
  %s4 = inlined_call_operand.vmem [shape: f32[1,128], index: 4, kind: input, shape index: {}]
  %s5 = inlined_call_operand.vmem [shape: f32[20,128], index: 5, kind: output, shape index: {}]
  %s6 = sld [smem:[#allocation0]]
  $region53: #{dnn_classifier_forward.1} parent=0
    _
  %s8 = ssub.s32 1, %s6
  %s9 = scalar_select 0, %s8, %s6
  loop: start=0, step=1, limit=5
  $region2: #{dnn_classifier_forward.1} parent=0 // loop_pre_header
    _
  $region3: #{dnn_classifier_forward.1} parent=0 // loop_header
    %s11 = sphi 0, %s15
    %p12 = scmp.ge.s32.totalorder %s11, 5
    %s21 = sphi 0, %s23
    %s24 = sphi 0, %s21
    %s25 = sphi 0, %s24
    %s41 = sphi 0, %s25
    %s45 = sphi 0, %s45
    %s47 = sphi 0, %s45
    %s48 = sphi 0, %s47
    %s62 = sphi 0, %s48
    %s66 = sphi 0, %s66
    %s68 = sphi 0, %s66
    %s69 = sphi 0, %s68
    %s83 = sphi 0, %s69
    %s87 = sphi 0, %s87
    %s89 = sphi 0, %s87
    %s90 = sphi 0, %s89
    %s104 = sphi 0, %s90
    %s108 = sphi 0, %s108
    %s110 = sphi 0, %s108
    %s111 = sphi 0, %s110
    %s125 = sphi 0, %s111
    %s131 = sphi 0, %s133
    %s134 = sphi 0, %s131
    %s135 = sphi 0, %s134
    %s151 = sphi 0, %s135
  $region4: #{dnn_classifier_forward.1} parent=0 // loop_header_branch
    %14 = sbr.rel (%p12) target = $region8
  $region5: #{dnn_classifier_forward.1} parent=0 // loop_body
    %s16 = ssub.s32 %s11, 1
    %s17 = ssub.s32 %s11, 2
    %s18 = sadd.s32 %s11, 1
    %s19 = ssub.s32 %s11, %s18
    %p20 = scmp.eq.s32.totalorder %s19, 0
    %s22 = sadd.s32 %s21, 1
    %s23 = scalar_select %p20, %s21, %s22
    %p26 = pneg %p20
    %p27 = scmp.eq.s32.totalorder %s11, 2
    %p28 = por %p26, %p27
    %p29 = scmp.ne.s32.totalorder %s21, %s24
    %p30 = scmp.eq.s32.totalorder %s11, 0
    %p31 = por %p29, %p30
    %p32 = scmp.ne.s32.totalorder %s21, %s24
    %p33 = scmp.eq.s32.totalorder %s16, 2
    %p34 = por %p32, %p33
    %p35 = scmp.ne.s32.totalorder %s24, %s25
    %p36 = scmp.eq.s32.totalorder %s16, 0
    %p37 = por %p35, %p36
    %p38 = scmp.ne.s32.totalorder %s24, %s25
    %p39 = scmp.eq.s32.totalorder %s17, 2
    %p40 = por %p38, %p39
    %p42 = scmp.ne.s32.totalorder %s25, %s41
    %p43 = scmp.eq.s32.totalorder %s17, 0
    %p44 = por %p42, %p43
    %s46 = sadd.s32 %s45, 1
    %p49 = scmp.eq.s32.totalorder %s11, 2
    %p50 = scmp.ne.s32.totalorder %s45, %s47
    %p51 = scmp.eq.s32.totalorder %s11, 0
    %p52 = por %p50, %p51
    %p53 = scmp.ne.s32.totalorder %s45, %s47
    %p54 = scmp.eq.s32.totalorder %s16, 2
    %p55 = por %p53, %p54
    %p56 = scmp.ne.s32.totalorder %s47, %s48
    %p57 = scmp.eq.s32.totalorder %s16, 0
    %p58 = por %p56, %p57
    %p59 = scmp.ne.s32.totalorder %s47, %s48
    %p60 = scmp.eq.s32.totalorder %s17, 2
    %p61 = por %p59, %p60
    %p63 = scmp.ne.s32.totalorder %s48, %s62
    %p64 = scmp.eq.s32.totalorder %s17, 0
    %p65 = por %p63, %p64
    %s67 = sadd.s32 %s66, 1
    %p70 = scmp.eq.s32.totalorder %s11, 2
    %p71 = scmp.ne.s32.totalorder %s66, %s68
    %p72 = scmp.eq.s32.totalorder %s11, 0
    %p73 = por %p71, %p72
    %p74 = scmp.ne.s32.totalorder %s66, %s68
    %p75 = scmp.eq.s32.totalorder %s16, 2
    %p76 = por %p74, %p75
    %p77 = scmp.ne.s32.totalorder %s68, %s69
    %p78 = scmp.eq.s32.totalorder %s16, 0
    %p79 = por %p77, %p78
    %p80 = scmp.ne.s32.totalorder %s68, %s69
    %p81 = scmp.eq.s32.totalorder %s17, 2
    %p82 = por %p80, %p81
    %p84 = scmp.ne.s32.totalorder %s69, %s83
    %p85 = scmp.eq.s32.totalorder %s17, 0
    %p86 = por %p84, %p85
    %s88 = sadd.s32 %s87, 1
    %p91 = scmp.eq.s32.totalorder %s11, 2
    %p92 = scmp.ne.s32.totalorder %s87, %s89
    %p93 = scmp.eq.s32.totalorder %s11, 0
    %p94 = por %p92, %p93
    %p95 = scmp.ne.s32.totalorder %s87, %s89
    %p96 = scmp.eq.s32.totalorder %s16, 2
    %p97 = por %p95, %p96
    %p98 = scmp.ne.s32.totalorder %s89, %s90
    %p99 = scmp.eq.s32.totalorder %s16, 0
    %p100 = por %p98, %p99
    %p101 = scmp.ne.s32.totalorder %s89, %s90
    %p102 = scmp.eq.s32.totalorder %s17, 2
    %p103 = por %p101, %p102
    %p105 = scmp.ne.s32.totalorder %s90, %s104
    %p106 = scmp.eq.s32.totalorder %s17, 0
    %p107 = por %p105, %p106
    %s109 = sadd.s32 %s108, 1
    %p112 = scmp.eq.s32.totalorder %s11, 2
    %p113 = scmp.ne.s32.totalorder %s108, %s110
    %p114 = scmp.eq.s32.totalorder %s11, 0
    %p115 = por %p113, %p114
    %p116 = scmp.ne.s32.totalorder %s108, %s110
    %p117 = scmp.eq.s32.totalorder %s16, 2
    %p118 = por %p116, %p117
    %p119 = scmp.ne.s32.totalorder %s110, %s111
    %p120 = scmp.eq.s32.totalorder %s16, 0
    %p121 = por %p119, %p120
    %p122 = scmp.ne.s32.totalorder %s110, %s111
    %p123 = scmp.eq.s32.totalorder %s17, 2
    %p124 = por %p122, %p123
    %p126 = scmp.ne.s32.totalorder %s111, %s125
    %p127 = scmp.eq.s32.totalorder %s17, 0
    %p128 = por %p126, %p127
    %s129 = ssub.s32 %s11, %s18
    %p130 = scmp.eq.s32.totalorder %s129, 0
    %s132 = sadd.s32 %s131, 1
    %s133 = scalar_select %p130, %s131, %s132
    %p136 = pneg %p130
    %p137 = scmp.eq.s32.totalorder %s11, 2
    %p138 = por %p136, %p137
    %p139 = scmp.ne.s32.totalorder %s131, %s134
    %p140 = scmp.eq.s32.totalorder %s11, 0
    %p141 = por %p139, %p140
    %p142 = scmp.ne.s32.totalorder %s131, %s134
    %p143 = scmp.eq.s32.totalorder %s16, 2
    %p144 = por %p142, %p143
    %p145 = scmp.ne.s32.totalorder %s134, %s135
    %p146 = scmp.eq.s32.totalorder %s16, 0
    %p147 = por %p145, %p146
    %p148 = scmp.ne.s32.totalorder %s134, %s135
    %p149 = scmp.eq.s32.totalorder %s17, 2
    %p150 = por %p148, %p149
    %p152 = scmp.ne.s32.totalorder %s135, %s151
    %p153 = scmp.eq.s32.totalorder %s17, 0
    %p154 = por %p152, %p153
    %p155 = scmp.le.s32.totalorder 1, %s11
    %p156 = scmp.lt.s32.totalorder %s11, 4
    %p157 = pnand %p155, %p156
    %p158 = pneg %p157
    // Predicated region
    $region9: #{dnn_classifier_forward.1} parent=5 // pred_check
      _
    $region10: #{dnn_classifier_forward.1} parent=5 // pred_check_branch
      %160 = sbr.rel (%p157) target = $region12
    $region11: #{dnn_classifier_forward.1} parent=5 // pred_region
      %s161 = ssub.s32 %s11, 1
      // Predicated region
      $region13: #{dnn_classifier_forward.1} parent=11 // pred_check
        %p162 = pneg %p58
      $region14: #{dnn_classifier_forward.1} parent=11 // pred_check_branch
        %164 = sbr.rel (%p162) target = $region16
      $region15: #{dnn_classifier_forward.1} parent=11 // pred_region
        _
      $region16: #{dnn_classifier_forward.1} parent=11 // pred_fallthru
        _
      // Predicated region
      $region17: #{dnn_classifier_forward.1} parent=11 // pred_check
        %p165 = pneg %p79
      $region18: #{dnn_classifier_forward.1} parent=11 // pred_check_branch
        %167 = sbr.rel (%p165) target = $region20
      $region19: #{dnn_classifier_forward.1} parent=11 // pred_region
        _
      $region20: #{dnn_classifier_forward.1} parent=11 // pred_fallthru
        _
      // Predicated region
      $region21: #{dnn_classifier_forward.1} parent=11 // pred_check
        %p168 = pneg %p100
      $region22: #{dnn_classifier_forward.1} parent=11 // pred_check_branch
        %170 = sbr.rel (%p168) target = $region24
      $region23: #{dnn_classifier_forward.1} parent=11 // pred_region
        _
      $region24: #{dnn_classifier_forward.1} parent=11 // pred_fallthru
        _
      // Predicated region
      $region25: #{dnn_classifier_forward.1} parent=11 // pred_check
        %p171 = pneg %p121
      $region26: #{dnn_classifier_forward.1} parent=11 // pred_check_branch
        %173 = sbr.rel (%p171) target = $region28
      $region27: #{dnn_classifier_forward.1} parent=11 // pred_region
        _
      $region28: #{dnn_classifier_forward.1} parent=11 // pred_fallthru
        _
    $region12: #{dnn_classifier_forward.1} parent=5 // pred_fallthru
      _
    %p174 = scmp.lt.s32.totalorder %s11, 3
    // Predicated region
    $region29: #{dnn_classifier_forward.1} parent=5 // pred_check
      %p175 = pneg %p174
    $region30: #{dnn_classifier_forward.1} parent=5 // pred_check_branch
      %177 = sbr.rel (%p175) target = $region32
    $region31: #{dnn_classifier_forward.1} parent=5 // pred_region
      // Predicated region
      $region33: #{dnn_classifier_forward.1} parent=31 // pred_check
        %p178 = pneg %p31
      $region34: #{dnn_classifier_forward.1} parent=31 // pred_check_branch
        %180 = sbr.rel (%p178) target = $region36
      $region35: #{dnn_classifier_forward.1} parent=31 // pred_region
        %p181 = scmp.lt.s32.totalorder %s11, 2
        %s182 = scalar_select %p181, %s11, 2
        %s183 = smul.addr %s182, 8
        %s184 = scalar_lea.vmem %s0, %s183
      $region36: #{dnn_classifier_forward.1} parent=31 // pred_fallthru
        _
    $region32: #{dnn_classifier_forward.1} parent=5 // pred_fallthru
      _
    %p185 = scmp.le.s32.totalorder 1, %s11
    %p186 = scmp.lt.s32.totalorder %s11, 4
    %p187 = pnand %p185, %p186
    %p188 = pneg %p187
    // Predicated region
    $region37: #{dnn_classifier_forward.1} parent=5 // pred_check
      _
    $region38: #{dnn_classifier_forward.1} parent=5 // pred_check_branch
      %190 = sbr.rel (%p187) target = $region40
    $region39: #{dnn_classifier_forward.1} parent=5 // pred_region
      %s191 = ssub.s32 %s11, 1
      %p192 = scmp.lt.s32.totalorder %s16, 2
      %s193 = scalar_select %p192, %s16, 2
      %s194 = smul.addr %s193, 8
      %s195 = scalar_lea.vmem %s0, %s194
      %p196 = pneg %p37
      %p197 = pneg %p34
      %p198 = pneg %p58
      %p199 = pneg %p55
      %p200 = pneg %p79
      %p201 = pneg %p76
      %p202 = pneg %p100
      %p203 = pneg %p97
      %p204 = pneg %p121
      %p205 = pneg %p118
      %p206 = pneg %p147
      %p207 = pneg %p144
      %p208 = scmp.lt.s32.totalorder %s16, 2
      %s209 = scalar_select %p208, %s16, 2
      %s210 = smul.addr %s209, 8
      %s211 = scalar_lea.vmem %s5, %s210
      %p212 = scmp.lt.s32.totalorder %s16, 2
      %s213 = scalar_select %p212, %s16, 2
      %s214 = smul.addr %s213, 8
      %s215 = scalar_lea.vmem %s0, %s214
      %p216 = scmp.lt.s32.totalorder %s16, 2
      %s217 = scalar_select %p216, %s16, 2
      %s218 = smul.addr %s217, 8
      %s219 = scalar_lea.vmem %s5, %s218
      %v221 = vld [vmem:[%s215] sm:$0xff]
      %v222 = vpack.c.bf16 %v221, %v221
      %v223 = vld [vmem:[%s1] sm:$0xf]
      %v224 = vld [vmem:[%s1 + $0x4] sm:$0xf]
      %v225 = vld [vmem:[%s1 + $0x8] sm:$0xf]
      %v226 = vld [vmem:[%s1 + $0xc] sm:$0xf]
      %v227 = vld [vmem:[%s2] sm:$0x1]
      %v229 = vlaneseq
      %v230 = vshrl.u32 %v229, 7
      %v231 = vsub.s32 0, %v230
      %v232 = vrot.slane %v227, %v231
      %v238 = vunpack.c.l.b16 %v223
      %v239 = vunpack.c.l.b16 %v224
      %v240 = vunpack.c.l.b16 %v225
      %v241 = vunpack.c.l.b16 %v226
      %v242 = vpack.c.b16 %v239, %v238
      %v243 = vpack.c.b16 %v241, %v240
      %vm246 = vcmask 261120
      %v248 = vsel %vm246, %v222, 0
      %250 = vmatprep.subr.bf16.mxu0 0
      %251 = vmatpush1.bf16.msra.mxu0 0
      %252 = vmatprep.subr.bf16.mxu0 0
      %253 = vmatpush1.bf16.msra.mxu0 0
      %254 = vmatprep.subr.bf16.mxu0 0
      %255 = vmatpush1.bf16.msra.mxu0 0
      %256 = vmatprep.subr.bf16.mxu0 0
      %257 = vmatpush1.bf16.msra.mxu0 0
      %258 = vmatprep.subr.bf16.mxu0 0
      %259 = vmatpush1.bf16.msra.mxu0 0
      %260 = vmatprep.subr.bf16.mxu0 0
      %261 = vmatpush1.bf16.msra.mxu0 0
      %262 = vmatprep.subr.bf16.mxu0 0
      %263 = vmatpush1.bf16.msra.mxu0 %v243
      %264 = vmatprep.subr.bf16.mxu0 0
      %265 = vmatpush1.bf16.msra.mxu0 %v242
      %266 = vmatprep.subr.bf16.mxu0 0
      %267 = vmatpush2.bf16.msra.mxu0 0
      %268 = vmatprep.subr.bf16.mxu0 0
      %269 = vmatpush2.bf16.msra.mxu0 0
      %270 = vmatprep.subr.bf16.mxu0 0
      %271 = vmatpush2.bf16.msra.mxu0 0
      %272 = vmatprep.subr.bf16.mxu0 0
      %273 = vmatpush2.bf16.msra.mxu0 0
      %274 = vmatprep.subr.bf16.mxu0 0
      %275 = vmatpush2.bf16.msra.mxu0 0
      %276 = vmatprep.subr.bf16.mxu0 0
      %277 = vmatpush2.bf16.msra.mxu0 0
      %278 = vmatprep.subr.bf16.mxu0 0
      %279 = vmatpush2.bf16.msra.mxu0 0
      %280 = vmatprep.subr.bf16.mxu0 0
      %281 = vmatpush2.bf16.msra.mxu0 0
      %282 = vmatprep.mubr.bf16.mxu0 0
      %283 = vmatmul.mubr.bf16.gmra.mxu0 %v248
      %v284 = vpop.f32.mrf.mxu0
      %v285 = vadd.f32 %v232, %v284
      %v286 = vpop.f32.mrf.mxu0
      %v287 = vpop.f32.mrf.mxu0
      %v288 = vpop.f32.mrf.mxu0
      %289 = vdwg.mxu0
      %v290 = vmax.f32 %v285, 0.0
      %v291 = vpack.c.bf16 %v290, %v290
      %v292 = vld [vmem:[%s3] sm:$0xf]
      %v293 = vld [vmem:[%s3 + $0x4] sm:$0xf]
      %v294 = vld [vmem:[%s3 + $0x8] sm:$0xf]
      %v295 = vld [vmem:[%s3 + $0xc] sm:$0xf]
      %v296 = vld [vmem:[%s3 + $0x10] sm:$0xf]
      %v297 = vld [vmem:[%s3 + $0x14] sm:$0xf]
      %v298 = vld [vmem:[%s3 + $0x18] sm:$0xf]
      %v299 = vld [vmem:[%s3 + $0x1c] sm:$0xf]
      %v300 = vld [vmem:[%s3 + $0x20] sm:$0xf]
      %v301 = vld [vmem:[%s3 + $0x24] sm:$0xf]
      %v302 = vld [vmem:[%s3 + $0x28] sm:$0xf]
      %v303 = vld [vmem:[%s3 + $0x2c] sm:$0xf]
      %v304 = vld [vmem:[%s3 + $0x30] sm:$0xf]
      %v305 = vld [vmem:[%s3 + $0x34] sm:$0xf]
      %v306 = vld [vmem:[%s3 + $0x38] sm:$0xf]
      %v307 = vld [vmem:[%s3 + $0x3c] sm:$0xf]
      %v308 = vld [vmem:[%s4] sm:$0x1]
      %v310 = vlaneseq
      %v311 = vshrl.u32 %v310, 7
      %v312 = vsub.s32 0, %v311
      %v313 = vrot.slane %v308, %v312
      %v331 = vunpack.c.l.b16 %v292
      %v332 = vunpack.c.l.b16 %v293
      %v333 = vunpack.c.l.b16 %v294
      %v334 = vunpack.c.l.b16 %v295
      %v335 = vunpack.c.l.b16 %v296
      %v336 = vunpack.c.l.b16 %v297
      %v337 = vunpack.c.l.b16 %v298
      %v338 = vunpack.c.l.b16 %v299
      %v339 = vunpack.c.l.b16 %v300
      %v340 = vunpack.c.l.b16 %v301
      %v341 = vunpack.c.l.b16 %v302
      %v342 = vunpack.c.l.b16 %v303
      %v343 = vunpack.c.l.b16 %v304
      %v344 = vunpack.c.l.b16 %v305
      %v345 = vunpack.c.l.b16 %v306
      %v346 = vunpack.c.l.b16 %v307
      %v347 = vpack.c.b16 %v332, %v331
      %v348 = vpack.c.b16 %v334, %v333
      %v349 = vpack.c.b16 %v336, %v335
      %v350 = vpack.c.b16 %v338, %v337
      %v351 = vpack.c.b16 %v340, %v339
      %v352 = vpack.c.b16 %v342, %v341
      %v353 = vpack.c.b16 %v344, %v343
      %v354 = vpack.c.b16 %v346, %v345
      %363 = vmatprep.subr.bf16.mxu0 0
      %364 = vmatpush1.bf16.msra.mxu0 %v354
      %365 = vmatprep.subr.bf16.mxu0 0
      %366 = vmatpush1.bf16.msra.mxu0 %v353
      %367 = vmatprep.subr.bf16.mxu0 0
      %368 = vmatpush1.bf16.msra.mxu0 %v352
      %369 = vmatprep.subr.bf16.mxu0 0
      %370 = vmatpush1.bf16.msra.mxu0 %v351
      %371 = vmatprep.subr.bf16.mxu0 0
      %372 = vmatpush1.bf16.msra.mxu0 %v350
      %373 = vmatprep.subr.bf16.mxu0 0
      %374 = vmatpush1.bf16.msra.mxu0 %v349
      %375 = vmatprep.subr.bf16.mxu0 0
      %376 = vmatpush1.bf16.msra.mxu0 %v348
      %377 = vmatprep.subr.bf16.mxu0 0
      %378 = vmatpush1.bf16.msra.mxu0 %v347
      %379 = vmatprep.subr.bf16.mxu0 0
      %380 = vmatpush2.bf16.msra.mxu0 0
      %381 = vmatprep.subr.bf16.mxu0 0
      %382 = vmatpush2.bf16.msra.mxu0 0
      %383 = vmatprep.subr.bf16.mxu0 0
      %384 = vmatpush2.bf16.msra.mxu0 0
      %385 = vmatprep.subr.bf16.mxu0 0
      %386 = vmatpush2.bf16.msra.mxu0 0
      %387 = vmatprep.subr.bf16.mxu0 0
      %388 = vmatpush2.bf16.msra.mxu0 0
      %389 = vmatprep.subr.bf16.mxu0 0
      %390 = vmatpush2.bf16.msra.mxu0 0
      %391 = vmatprep.subr.bf16.mxu0 0
      %392 = vmatpush2.bf16.msra.mxu0 0
      %393 = vmatprep.subr.bf16.mxu0 0
      %394 = vmatpush2.bf16.msra.mxu0 0
      %395 = vmatprep.mubr.bf16.mxu0 0
      %396 = vmatmul.mubr.bf16.gmra.mxu0 %v291
      %v397 = vpop.f32.mrf.mxu0
      %v398 = vadd.f32 %v313, %v397
      %v399 = vpop.f32.mrf.mxu0
      %v400 = vpop.f32.mrf.mxu0
      %v401 = vpop.f32.mrf.mxu0
      %402 = vdwg.mxu0
      %403 = vmax.xlane.f32.xlu0 %v398
      %v404 = vpop.xlane.xlu0 %403
      %v405 = vsub.f32 %v398, %v404
      %v406 = vmul.f32 %v405, 1.442695
      %v407 = vpow.pop %v406
      %408 = vadd.xlane.f32.xlu0 %v407
      %v409 = vpop.xlane.xlu0 %408
      %v410 = vrcp.pop %v409
      %v411 = vmul.f32 %v407, %v410
      %412 = vst [vmem:[%s219] sm:$0xff] %v411
      %p413 = scmp.lt.s32.totalorder %s16, 2
      %s414 = scalar_select %p413, %s16, 2
      %s415 = smul.addr %s414, 8
      %s416 = scalar_lea.vmem %s5, %s415
      // Predicated region
      $region41: #{dnn_classifier_forward.1} parent=39 // pred_check
        %p417 = pneg %p144
      $region42: #{dnn_classifier_forward.1} parent=39 // pred_check_branch
        %419 = sbr.rel (%p417) target = $region44
      $region43: #{dnn_classifier_forward.1} parent=39 // pred_region
        _
      $region44: #{dnn_classifier_forward.1} parent=39 // pred_fallthru
        _
    $region40: #{dnn_classifier_forward.1} parent=5 // pred_fallthru
      _
    %p420 = scmp.le.s32.totalorder 2, %s11
    // Predicated region
    $region45: #{dnn_classifier_forward.1} parent=5 // pred_check
      %p421 = pneg %p420
    $region46: #{dnn_classifier_forward.1} parent=5 // pred_check_branch
      %423 = sbr.rel (%p421) target = $region48
    $region47: #{dnn_classifier_forward.1} parent=5 // pred_region
      %s424 = ssub.s32 %s11, 2
      // Predicated region
      $region49: #{dnn_classifier_forward.1} parent=47 // pred_check
        %p425 = pneg %p150
      $region50: #{dnn_classifier_forward.1} parent=47 // pred_check_branch
        %427 = sbr.rel (%p425) target = $region52
      $region51: #{dnn_classifier_forward.1} parent=47 // pred_region
        %p428 = scmp.lt.s32.totalorder %s17, 2
        %s429 = scalar_select %p428, %s17, 2
        %s430 = smul.addr %s429, 8
        %s431 = scalar_lea.vmem %s5, %s430
      $region52: #{dnn_classifier_forward.1} parent=47 // pred_fallthru
        _
    $region48: #{dnn_classifier_forward.1} parent=5 // pred_fallthru
      _
  $region6: #{dnn_classifier_forward.1} parent=0 // loop_footer
    %s15 = sadd.s32 1, %s11
  $region7: #{dnn_classifier_forward.1} parent=0 // loop_footer_branch
    %10 = sbr.rel target = $region3
  $region8: #{dnn_classifier_forward.1} parent=0 // loop_exit
    _

</llo_original>
